<compile_context>
chip_gen: v7x
topology: tpu7x:2x2x1
jax: 0.10.0
libtpu: 0.0.40
codegen_flags: <defaults>
</compile_context>

<pallas_src>
import jax
import jax.numpy as jnp
from jax.experimental import pallas as pl
from jax.experimental.pallas import tpu as pltpu

HIDDEN = 30
_LANE = 128


def _round_up(x, m):
    return ((x + m - 1) // m) * m


def _mlp_kernel(state_ref, w1_ref, b1_ref, w2_ref, b2_ref, out_ref):
    # state: (TB, In) bf16, w1: (In, Hp) bf16, b1: (1, Hp) f32,
    # w2: (Hp, Ap) bf16, b2: (1, Ap) f32, out: (TB, Ap) f32
    x = state_ref[...]

    # fc1: x @ w1 (MXU, f32 accumulate) + bias, ReLU in f32 on the VPU.
    h = jnp.dot(x, w1_ref[...], preferred_element_type=jnp.float32)
    h = jnp.maximum(h + b1_ref[...], 0.0)

    # fc2: cast activations to bf16 to stay on the fast MXU path, f32 accumulate.
    q = jnp.dot(h.astype(jnp.bfloat16), w2_ref[...],
                preferred_element_type=jnp.float32)
    out_ref[...] = q + b2_ref[...]


def network_forward(state, w1, b1, w2, b2, *, block_b=512):
    """Pallas forward pass of Network.

    state: (B, input_size) float32
    w1:    (HIDDEN, input_size), b1: (HIDDEN,)     -- PyTorch nn.Linear layout
    w2:    (nb_action, HIDDEN),  b2: (nb_action,)
    returns q_values: (B, nb_action) float32
    """
    B, In = state.shape
    H = w1.shape[0]
    A = w2.shape[0]

    # Lane-dense padded sizes for the hidden / action axes.
    Hp = _round_up(H, _LANE)
    Ap = _round_up(A, _LANE)

    # Pre-transpose + zero-pad weights once (free layout plumbing; weights are
    # static). bf16 for MXU throughput, biases stay f32 for the epilogue.
    w1t = jnp.zeros((In, Hp), jnp.bfloat16).at[:, :H].set(w1.T.astype(jnp.bfloat16))
    b1p = jnp.zeros((1, Hp), jnp.float32).at[:, :H].set(b1.astype(jnp.float32))
    w2t = jnp.zeros((Hp, Ap), jnp.bfloat16).at[:H, :A].set(w2.T.astype(jnp.bfloat16))
    b2p = jnp.zeros((1, Ap), jnp.float32).at[:, :A].set(b2.astype(jnp.float32))

    # Batch tiling: TB rows per grid step (sublane-aligned), pad B up to a
    # multiple of TB so the BlockSpec tiles exactly.
    TB = min(block_b, _round_up(B, 8))
    B_pad = _round_up(B, TB)
    state_bf16 = state.astype(jnp.bfloat16)
    if B_pad != B:
        state_bf16 = jnp.pad(state_bf16, ((0, B_pad - B), (0, 0)))

    grid = (B_pad // TB,)

    out_pad = pl.pallas_call(
        _mlp_kernel,
        out_shape=jax.ShapeDtypeStruct((B_pad, Ap), jnp.float32),
        grid_spec=pl.GridSpec(
            grid=grid,
            in_specs=[
                # state streams per batch tile
                pl.BlockSpec((TB, In), lambda i: (i, 0)),
                # weights / biases stay VMEM-resident across all grid steps
                pl.BlockSpec((In, Hp), lambda i: (0, 0)),
                pl.BlockSpec((1, Hp), lambda i: (0, 0)),
                pl.BlockSpec((Hp, Ap), lambda i: (0, 0)),
                pl.BlockSpec((1, Ap), lambda i: (0, 0)),
            ],
            out_specs=pl.BlockSpec((TB, Ap), lambda i: (i, 0)),
        ),
        compiler_params=pltpu.CompilerParams(
            dimension_semantics=("parallel",)),
    )(state_bf16, w1t, b1p, w2t, b2p)

    # Strip batch padding and the lane padding of the action axis.
    return out_pad[:B, :A]


def init_params(key, input_size, nb_action):
    """Deterministic init matching nn.Linear default (uniform +/- 1/sqrt(fan_in))."""
    k1, k2, k3, k4 = jax.random.split(key, 4)
    bound1 = 1.0 / jnp.sqrt(jnp.float32(input_size))
    bound2 = 1.0 / jnp.sqrt(jnp.float32(HIDDEN))
    w1 = jax.random.uniform(k1, (HIDDEN, input_size), jnp.float32, -bound1, bound1)
    b1 = jax.random.uniform(k2, (HIDDEN,), jnp.float32, -bound1, bound1)
    w2 = jax.random.uniform(k3, (nb_action, HIDDEN), jnp.float32, -bound2, bound2)
    b2 = jax.random.uniform(k4, (nb_action,), jnp.float32, -bound2, bound2)
    return w1, b1, w2, b2


def _reference(state, w1, b1, w2, b2):
    # Plain-JAX reference in f32 (same math as the PyTorch forward).
    return jnp.maximum(state @ w1.T + b1, 0.0) @ w2.T + b2


if __name__ == "__main__":
    input_size = 5   # e.g. a 5-dim sensor state
    nb_action = 3

    key = jax.random.PRNGKey(0)
    kx, kp, kx2 = jax.random.split(key, 3)
    w1, b1, w2, b2 = init_params(kp, input_size, nb_action)

    # Small inference-style batch (single grid step).
    batch = 8
    state = jax.random.normal(kx, (batch, input_size), jnp.float32)
    q_values = network_forward(state, w1, b1, w2, b2)
    jax.block_until_ready(q_values)
    ref = _reference(state, w1, b1, w2, b2)
    assert q_values.shape == (batch, nb_action)
    # bf16 inputs with f32 accumulation -> relaxed tolerance vs. the f32 reference.
    assert jnp.allclose(q_values, ref, atol=5e-2, rtol=5e-2)

    # Larger replay-minibatch-style batch (exercises the batch grid + padding).
    batch2 = 1000
    state2 = jax.random.normal(kx2, (batch2, input_size), jnp.float32)
    q2 = network_forward(state2, w1, b1, w2, b2)
    jax.block_until_ready(q2)
    ref2 = _reference(state2, w1, b1, w2, b2)
    assert q2.shape == (batch2, nb_action)
    assert jnp.allclose(q2, ref2, atol=5e-2, rtol=5e-2)

    print("KERNEL_OK")
</pallas_src>

<mosaic_0001>
module attributes {stable_mosaic.version = 11 : i64} {
  func.func @_mlp_kernel(%arg0: i32, %arg1: memref<8x5xbf16, #tpu.memory_space<vmem>>, %arg2: memref<5x128xbf16, #tpu.memory_space<vmem>>, %arg3: memref<1x128xf32, #tpu.memory_space<vmem>>, %arg4: memref<128x128xbf16, #tpu.memory_space<vmem>>, %arg5: memref<1x128xf32, #tpu.memory_space<vmem>>, %arg6: memref<8x128xf32, #tpu.memory_space<vmem>>) attributes {dimension_semantics = [#tpu.dimension_semantics<parallel>], iteration_bounds = array<i64: 1>, scalar_prefetch = 0 : i64, scratch_operands = 0 : i64, tpu.core_type = #tpu.core_type<tc>, window_params = [{transform_indices = @transform_0, window_bounds = array<i64: 8, 5>}, {pipeline_mode = #tpu.pipeline_mode<synchronous>, transform_indices = @transform_1, window_bounds = array<i64: 5, 128>}, {pipeline_mode = #tpu.pipeline_mode<synchronous>, transform_indices = @transform_2, window_bounds = array<i64: 1, 128>}, {pipeline_mode = #tpu.pipeline_mode<synchronous>, transform_indices = @transform_3, window_bounds = array<i64: 128, 128>}, {pipeline_mode = #tpu.pipeline_mode<synchronous>, transform_indices = @transform_4, window_bounds = array<i64: 1, 128>}, {transform_indices = @transform_5, window_bounds = array<i64: 8, 128>}]} {
    %c0 = arith.constant 0 : index
    %c0_0 = arith.constant 0 : index
    %0 = vector.load %arg1[%c0, %c0_0] : memref<8x5xbf16, #tpu.memory_space<vmem>>, vector<8x5xbf16>
    %c0_1 = arith.constant 0 : index
    %c0_2 = arith.constant 0 : index
    %1 = vector.load %arg2[%c0_1, %c0_2] : memref<5x128xbf16, #tpu.memory_space<vmem>>, vector<5x128xbf16>
    %cst = arith.constant dense<0.000000e+00> : vector<8x128xf32>
    %2 = tpu.matmul %0, %1, %cst {dimension_numbers = #tpu.dot_dimension_numbers<[1], [0], [0], [1], [0, 0, 1, 1], [], []>} : vector<8x5xbf16>, vector<5x128xbf16>, vector<8x128xf32> -> vector<8x128xf32>
    %c0_3 = arith.constant 0 : index
    %c0_4 = arith.constant 0 : index
    %3 = vector.load %arg3[%c0_3, %c0_4] : memref<1x128xf32, #tpu.memory_space<vmem>>, vector<1x128xf32>
    %4 = vector.broadcast %3 : vector<1x128xf32> to vector<8x128xf32>
    %5 = arith.addf %2, %4 : vector<8x128xf32>
    %cst_5 = arith.constant 0.000000e+00 : f32
    %6 = vector.broadcast %cst_5 : f32 to vector<8x128xf32>
    %7 = arith.maximumf %5, %6 : vector<8x128xf32>
    %8 = arith.truncf %7 : vector<8x128xf32> to vector<8x128xbf16>
    %c0_6 = arith.constant 0 : index
    %c0_7 = arith.constant 0 : index
    %9 = vector.load %arg4[%c0_6, %c0_7] : memref<128x128xbf16, #tpu.memory_space<vmem>>, vector<128x128xbf16>
    %cst_8 = arith.constant dense<0.000000e+00> : vector<8x128xf32>
    %10 = tpu.matmul %8, %9, %cst_8 {dimension_numbers = #tpu.dot_dimension_numbers<[1], [0], [0], [1], [0, 0, 1, 1], [], []>} : vector<8x128xbf16>, vector<128x128xbf16>, vector<8x128xf32> -> vector<8x128xf32>
    %c0_9 = arith.constant 0 : index
    %c0_10 = arith.constant 0 : index
    %11 = vector.load %arg5[%c0_9, %c0_10] : memref<1x128xf32, #tpu.memory_space<vmem>>, vector<1x128xf32>
    %12 = vector.broadcast %11 : vector<1x128xf32> to vector<8x128xf32>
    %13 = arith.addf %10, %12 : vector<8x128xf32>
    %c0_11 = arith.constant 0 : index
    %c0_12 = arith.constant 0 : index
    %14 = vector.load %arg6[%c0_11, %c0_12] : memref<8x128xf32, #tpu.memory_space<vmem>>, vector<8x128xf32>
    tpu.vector_store %arg6[%c0_11, %c0_12], %13 {strides = array<i32>} : memref<8x128xf32, #tpu.memory_space<vmem>>, vector<8x128xf32>,
    return
  }
  func.func @transform_0(%arg0: i32) -> (i32, i32) {
    %c0_i32 = arith.constant 0 : i32
    %c0_i32_0 = arith.constant 0 : i32
    return %arg0, %c0_i32 : i32, i32
  }
  func.func @transform_1(%arg0: i32) -> (i32, i32) {
    %c0_i32 = arith.constant 0 : i32
    %c0_i32_0 = arith.constant 0 : i32
    %c0_i32_1 = arith.constant 0 : i32
    return %c0_i32, %c0_i32_0 : i32, i32
  }
  func.func @transform_2(%arg0: i32) -> (i32, i32) {
    %c0_i32 = arith.constant 0 : i32
    %c0_i32_0 = arith.constant 0 : i32
    %c0_i32_1 = arith.constant 0 : i32
    return %c0_i32, %c0_i32_0 : i32, i32
  }
  func.func @transform_3(%arg0: i32) -> (i32, i32) {
    %c0_i32 = arith.constant 0 : i32
    %c0_i32_0 = arith.constant 0 : i32
    %c0_i32_1 = arith.constant 0 : i32
    return %c0_i32, %c0_i32_0 : i32, i32
  }
  func.func @transform_4(%arg0: i32) -> (i32, i32) {
    %c0_i32 = arith.constant 0 : i32
    %c0_i32_0 = arith.constant 0 : i32
    %c0_i32_1 = arith.constant 0 : i32
    return %c0_i32, %c0_i32_0 : i32, i32
  }
  func.func @transform_5(%arg0: i32) -> (i32, i32) {
    %c0_i32 = arith.constant 0 : i32
    %c0_i32_0 = arith.constant 0 : i32
    return %arg0, %c0_i32 : i32, i32
  }
}

</mosaic_0001>

<llo_original>
// kernel: tpu_custom_call.1
$region0: #{tpu_custom_call.1}
  #allocation0 [shape = 'u32[]', space=smem, size = 0x4, offset = 0x4, fixed_abs, tag = 'smem constant byte address 0x4 - core index']
  #allocation1 [shape = 'u32[144,128]{1,0:T(1,128)}', space=vmem, size = 0x12000, scoped, tag = 'internal scratch']
  %s0 = inlined_call_operand.hbm [shape: bf16[8,5], index: 0, kind: input, shape index: {}]
  %s1 = inlined_call_operand.hbm [shape: bf16[5,128], index: 1, kind: input, shape index: {}]
  %s2 = inlined_call_operand.vmem [shape: f32[1,128], index: 2, kind: input, shape index: {}]
  %s3 = inlined_call_operand.hbm [shape: bf16[128,128], index: 3, kind: input, shape index: {}]
  %s4 = inlined_call_operand.vmem [shape: f32[1,128], index: 4, kind: input, shape index: {}]
  %s5 = inlined_call_operand.hbm [shape: f32[8,128], index: 5, kind: output, shape index: {}]
  %s6 = sld [smem:[#allocation0]]
  $region42: #{tpu_custom_call.1} parent=0
    _
  %s8 = ssub.s32 1, %s6
  %s9 = scalar_select 0, %s8, %s6
  $region1: #{tpu_custom_call.1} parent=0
    #allocation2 [shape = 'u8[2048]{0}', space=vmem, size = 0x800, scoped, tag = 'input window, operand 0, single buffered']
    #allocation3 [shape = 's32[1]{0}', space=sflag, size = 0x4, scoped, tag = 'scoped memory for tpu_custom_call.1']
    #allocation4 [shape = 's32[1]{0}', space=sflag, size = 0x4, scoped, tag = 'scoped memory for tpu_custom_call.1']
    #allocation5 [shape = 'u8[2048]{0}', space=vmem, size = 0x800, scoped, tag = 'input window, operand 1, single buffered']
    #allocation6 [shape = 's32[1]{0}', space=sflag, size = 0x4, scoped, tag = 'scoped memory for tpu_custom_call.1']
    #allocation7 [shape = 'u8[32768]{0}', space=vmem, size = 0x8000, scoped, tag = 'input window, operand 3, single buffered']
    #allocation8 [shape = 'u8[4096]{0}', space=vmem, size = 0x1000, scoped, tag = 'output window, operand 0, single buffered']
    %10 = vsyncpa [#allocation3], 0
    %11 = vsyncpa [#allocation6], 0
    %12 = vsyncpa [#allocation4], 0
    // Predicated region
    $region2: #{tpu_custom_call.1} parent=1 // pred_check
      _
    $region3: #{tpu_custom_call.1} parent=1 // pred_check_branch
      %14 = sbr.rel (0) target = $region5
    $region4: #{tpu_custom_call.1} parent=1 // pred_region
      %s16 = ssub.s32 64, 64
      %17 = vsyncadd [#allocation3], %s16
      %s19 = sshll.u32 [#allocation2], 4
      %s20 = int_to_ptr.vmem [resolvable:$true] %s19
      %22 = dma.hbm_to_vmem [thread:$0]  %s0, 64, %s20, [#allocation3]
    $region5: #{tpu_custom_call.1} parent=1 // pred_fallthru
      _
    // Predicated region
    $region6: #{tpu_custom_call.1} parent=1 // pred_check
      _
    $region7: #{tpu_custom_call.1} parent=1 // pred_check_branch
      %24 = sbr.rel (0) target = $region9
    $region8: #{tpu_custom_call.1} parent=1 // pred_region
      %s26 = ssub.s32 64, 64
      %27 = vsyncadd [#allocation6], %s26
      %s29 = sshll.u32 [#allocation5], 4
      %s30 = int_to_ptr.vmem [resolvable:$true] %s29
      %32 = dma.hbm_to_vmem [thread:$0]  %s1, 64, %s30, [#allocation6]
    $region9: #{tpu_custom_call.1} parent=1 // pred_fallthru
      _
    // Predicated region
    $region10: #{tpu_custom_call.1} parent=1 // pred_check
      _
    $region11: #{tpu_custom_call.1} parent=1 // pred_check_branch
      %34 = sbr.rel (0) target = $region13
    $region12: #{tpu_custom_call.1} parent=1 // pred_region
      _
    $region13: #{tpu_custom_call.1} parent=1 // pred_fallthru
      _
    // Predicated region
    $region14: #{tpu_custom_call.1} parent=1 // pred_check
      _
    $region15: #{tpu_custom_call.1} parent=1 // pred_check_branch
      %36 = sbr.rel (0) target = $region17
    $region16: #{tpu_custom_call.1} parent=1 // pred_region
      %s38 = ssub.s32 1024, 1024
      %39 = vsyncadd [#allocation6], %s38
      %s40 = sshll.u32 [#allocation7], 4
      %s41 = int_to_ptr.vmem [resolvable:$true] %s40
      %46 = dma.hbm_to_vmem [thread:$0]  %s3, 1024, %s41, [#allocation6], 64, 64, 4
    $region17: #{tpu_custom_call.1} parent=1 // pred_fallthru
      _
    // Predicated region
    $region18: #{tpu_custom_call.1} parent=1 // pred_check
      _
    $region19: #{tpu_custom_call.1} parent=1 // pred_check_branch
      %48 = sbr.rel (0) target = $region21
    $region20: #{tpu_custom_call.1} parent=1 // pred_region
      _
    $region21: #{tpu_custom_call.1} parent=1 // pred_fallthru
      _
    // Predicated region
    $region22: #{tpu_custom_call.1} parent=1 // pred_check
      _
    $region23: #{tpu_custom_call.1} parent=1 // pred_check_branch
      %50 = sbr.rel (0) target = $region25
    $region24: #{tpu_custom_call.1} parent=1 // pred_region
      %51 = dma.done [#allocation3], 64
    $region25: #{tpu_custom_call.1} parent=1 // pred_fallthru
      _
    // Predicated region
    $region26: #{tpu_custom_call.1} parent=1 // pred_check
      _
    $region27: #{tpu_custom_call.1} parent=1 // pred_check_branch
      %53 = sbr.rel (0) target = $region29
    $region28: #{tpu_custom_call.1} parent=1 // pred_region
      %54 = dma.done [#allocation6], 64
    $region29: #{tpu_custom_call.1} parent=1 // pred_fallthru
      _
    // Predicated region
    $region30: #{tpu_custom_call.1} parent=1 // pred_check
      _
    $region31: #{tpu_custom_call.1} parent=1 // pred_check_branch
      %56 = sbr.rel (0) target = $region33
    $region32: #{tpu_custom_call.1} parent=1 // pred_region
      %57 = dma.done [#allocation6], 1024
    $region33: #{tpu_custom_call.1} parent=1 // pred_fallthru
      _
    %v59 = vld [vmem:[#allocation2] sm:$0xf]
    %v60 = vld [vmem:[#allocation5] sm:$0x7]
    %v61 = vld [vmem:[%s2] sm:$0x1]
    %v63 = vlaneseq
    %v64 = vshrl.u32 %v63, 7
    %v65 = vsub.s32 0, %v64
    %v66 = vrot.slane %v61, %v65
    %vm68 = vcmask 39936
    %v70 = vsel %vm68, %v59, 0
    %vm72 = vcmask 1041408
    %vm73 = vcmask 1042432
    %v74 = vsel %vm72, 4294967295, 65535
    %v75 = vsel %vm73, %v74, 0
    %v77 = vand.u32 %v60, %v75
    %79 = vmatprep.subr.bf16.mxu0 0
    %80 = vmatpush1.bf16.msra.mxu0 %v77
    %81 = vmatprep.subr.bf16.mxu0 0
    %82 = vmatpush1.bf16.msra.mxu0 0
    %83 = vmatprep.subr.bf16.mxu0 0
    %84 = vmatpush1.bf16.msra.mxu0 0
    %85 = vmatprep.subr.bf16.mxu0 0
    %86 = vmatpush1.bf16.msra.mxu0 0
    %87 = vmatprep.subr.bf16.mxu0 0
    %88 = vmatpush1.bf16.msra.mxu0 0
    %89 = vmatprep.subr.bf16.mxu0 0
    %90 = vmatpush1.bf16.msra.mxu0 0
    %91 = vmatprep.subr.bf16.mxu0 0
    %92 = vmatpush1.bf16.msra.mxu0 0
    %93 = vmatprep.subr.bf16.mxu0 0
    %94 = vmatpush1.bf16.msra.mxu0 0
    %95 = vmatprep.subr.bf16.mxu0 0
    %96 = vmatpush1.bf16.msra.mxu0 0
    %97 = vmatprep.subr.bf16.mxu0 0
    %98 = vmatpush1.bf16.msra.mxu0 0
    %99 = vmatprep.subr.bf16.mxu0 0
    %100 = vmatpush1.bf16.msra.mxu0 0
    %101 = vmatprep.subr.bf16.mxu0 0
    %102 = vmatpush1.bf16.msra.mxu0 0
    %103 = vmatprep.subr.bf16.mxu0 0
    %104 = vmatpush1.bf16.msra.mxu0 0
    %105 = vmatprep.subr.bf16.mxu0 0
    %106 = vmatpush1.bf16.msra.mxu0 0
    %107 = vmatprep.subr.bf16.mxu0 0
    %108 = vmatpush1.bf16.msra.mxu0 0
    %109 = vmatprep.subr.bf16.mxu0 0
    %110 = vmatpush1.bf16.msra.mxu0 0
    %111 = vmatprep.mubr.bf16.mxu0 0
    %112 = vmatmul.mubr.bf16.gmra.mrb[0].mxu0 %v70
    %v113 = vpop.f32.mrb[0].mxu0
    %v114 = vadd.f32 %v66, %v113
    %v115 = vpop.f32.mrb[0].mxu0
    %v116 = vpop.f32.mrb[0].mxu0
    %v117 = vpop.f32.mrb[0].mxu0
    %118 = vdwg.mxu0
    %v119 = vmax.f32 %v114, 0.0
    %v120 = vpack.c.bf16 %v119, %v119
    %v121 = vld [vmem:[#allocation7] sm:$0xf]
    %v122 = vld [vmem:[#allocation7 + $0x4] sm:$0xf]
    %v123 = vld [vmem:[#allocation7 + $0x8] sm:$0xf]
    %v124 = vld [vmem:[#allocation7 + $0xc] sm:$0xf]
    %v125 = vld [vmem:[#allocation7 + $0x10] sm:$0xf]
    %v126 = vld [vmem:[#allocation7 + $0x14] sm:$0xf]
    %v127 = vld [vmem:[#allocation7 + $0x18] sm:$0xf]
    %v128 = vld [vmem:[#allocation7 + $0x1c] sm:$0xf]
    %v129 = vld [vmem:[#allocation7 + $0x20] sm:$0xf]
    %v130 = vld [vmem:[#allocation7 + $0x24] sm:$0xf]
    %v131 = vld [vmem:[#allocation7 + $0x28] sm:$0xf]
    %v132 = vld [vmem:[#allocation7 + $0x2c] sm:$0xf]
    %v133 = vld [vmem:[#allocation7 + $0x30] sm:$0xf]
    %v134 = vld [vmem:[#allocation7 + $0x34] sm:$0xf]
    %v135 = vld [vmem:[#allocation7 + $0x38] sm:$0xf]
    %v136 = vld [vmem:[#allocation7 + $0x3c] sm:$0xf]
    %v137 = vld [vmem:[%s4] sm:$0x1]
    %v139 = vlaneseq
    %v140 = vshrl.u32 %v139, 7
    %v141 = vsub.s32 0, %v140
    %v142 = vrot.slane %v137, %v141
    %v160 = vunpack.c.l.b16 %v121
    %v161 = vunpack.c.l.b16 %v122
    %v162 = vunpack.c.l.b16 %v123
    %v163 = vunpack.c.l.b16 %v124
    %v164 = vunpack.c.l.b16 %v125
    %v165 = vunpack.c.l.b16 %v126
    %v166 = vunpack.c.l.b16 %v127
    %v167 = vunpack.c.l.b16 %v128
    %v168 = vunpack.c.l.b16 %v129
    %v169 = vunpack.c.l.b16 %v130
    %v170 = vunpack.c.l.b16 %v131
    %v171 = vunpack.c.l.b16 %v132
    %v172 = vunpack.c.l.b16 %v133
    %v173 = vunpack.c.l.b16 %v134
    %v174 = vunpack.c.l.b16 %v135
    %v175 = vunpack.c.l.b16 %v136
    %v176 = vpack.c.b16 %v161, %v160
    %v177 = vpack.c.b16 %v163, %v162
    %v178 = vpack.c.b16 %v165, %v164
    %v179 = vpack.c.b16 %v167, %v166
    %v180 = vpack.c.b16 %v169, %v168
    %v181 = vpack.c.b16 %v171, %v170
    %v182 = vpack.c.b16 %v173, %v172
    %v183 = vpack.c.b16 %v175, %v174
    %192 = vmatprep.subr.bf16.mxu0 0
    %193 = vmatpush1.bf16.msra.mxu0 %v176
    %194 = vmatprep.subr.bf16.mxu0 0
    %195 = vmatpush1.bf16.msra.mxu0 %v177
    %196 = vmatprep.subr.bf16.mxu0 0
    %197 = vmatpush1.bf16.msra.mxu0 %v178
    %198 = vmatprep.subr.bf16.mxu0 0
    %199 = vmatpush1.bf16.msra.mxu0 %v179
    %200 = vmatprep.subr.bf16.mxu0 0
    %201 = vmatpush1.bf16.msra.mxu0 %v180
    %202 = vmatprep.subr.bf16.mxu0 0
    %203 = vmatpush1.bf16.msra.mxu0 %v181
    %204 = vmatprep.subr.bf16.mxu0 0
    %205 = vmatpush1.bf16.msra.mxu0 %v182
    %206 = vmatprep.subr.bf16.mxu0 0
    %207 = vmatpush1.bf16.msra.mxu0 %v183
    %208 = vmatprep.subr.bf16.mxu0 0
    %209 = vmatpush1.bf16.msra.mxu0 0
    %210 = vmatprep.subr.bf16.mxu0 0
    %211 = vmatpush1.bf16.msra.mxu0 0
    %212 = vmatprep.subr.bf16.mxu0 0
    %213 = vmatpush1.bf16.msra.mxu0 0
    %214 = vmatprep.subr.bf16.mxu0 0
    %215 = vmatpush1.bf16.msra.mxu0 0
    %216 = vmatprep.subr.bf16.mxu0 0
    %217 = vmatpush1.bf16.msra.mxu0 0
    %218 = vmatprep.subr.bf16.mxu0 0
    %219 = vmatpush1.bf16.msra.mxu0 0
    %220 = vmatprep.subr.bf16.mxu0 0
    %221 = vmatpush1.bf16.msra.mxu0 0
    %222 = vmatprep.subr.bf16.mxu0 0
    %223 = vmatpush1.bf16.msra.mxu0 0
    %224 = vmatprep.mubr.bf16.mxu0 0
    %225 = vmatmul.mubr.bf16.gmra.mrb[0].mxu0 %v120
    %v226 = vpop.f32.mrb[0].mxu0
    %v227 = vadd.f32 %v142, %v226
    %v228 = vpop.f32.mrb[0].mxu0
    %v229 = vpop.f32.mrb[0].mxu0
    %v230 = vpop.f32.mrb[0].mxu0
    %231 = vdwg.mxu0
    %232 = vst [vmem:[#allocation8] sm:$0xff] %v227
    // Predicated region
    $region34: #{tpu_custom_call.1} parent=1 // pred_check
      _
    $region35: #{tpu_custom_call.1} parent=1 // pred_check_branch
      %234 = sbr.rel (0) target = $region37
    $region36: #{tpu_custom_call.1} parent=1 // pred_region
      %s236 = ssub.s32 128, 128
      %237 = vsyncadd [#allocation4], %s236
      %s239 = sshll.u32 [#allocation8], 4
      %s240 = int_to_ptr.vmem [resolvable:$true] %s239
      %242 = dma.vmem_to_hbm [thread:$0]  %s240, 128, %s5, [#allocation4]
    $region37: #{tpu_custom_call.1} parent=1 // pred_fallthru
      _
    // Predicated region
    $region38: #{tpu_custom_call.1} parent=1 // pred_check
      _
    $region39: #{tpu_custom_call.1} parent=1 // pred_check_branch
      %244 = sbr.rel (0) target = $region41
    $region40: #{tpu_custom_call.1} parent=1 // pred_region
      %245 = dma.done [#allocation4], 128
    $region41: #{tpu_custom_call.1} parent=1 // pred_fallthru
      _
    %246 = vsyncpa [#allocation3], 1
    %247 = vsyncpa [#allocation6], 1
    %248 = vsyncpa [#allocation4], 1

</llo_original>
